<compile_context>
chip_gen: v6e
topology: v6e:2x2x1
jax: 0.10.0
libtpu: 0.0.40
codegen_flags: <defaults>
</compile_context>

<pallas_src>
import functools

import jax
import jax.numpy as jnp
from jax.experimental import pallas as pl
from jax.experimental.pallas import tpu as pltpu


KSIZE = 3           # kernel_size=3, stride=1, pad=1 (module defaults)
LEAKY_SLOPE = 0.01  # InPlaceABN default activation slope


def _round_up(x, m):
    return (x + m - 1) // m * m


def _conv_bn_lrelu_plane_kernel(x0_ref, x1_ref, x2_ref, w_ref, b_ref, o_ref,
                                patch_ref, acc_ref, *, H, W, Cin, Cin_pad):
    """One grid step = one output depth-plane of one batch element.

    x{0,1,2}_ref: (1, 1, Cin, S)        padded input planes d, d+1, d+2; S = (H+3)*(W+2)
    w_ref:        (3, Cout, 9*Cin_pad)  BN-scale-folded weights; K order = (kh, kw, ci_pad)
    b_ref:        (Cout, 1)             folded BN bias (f32)
    o_ref:        (1, 1, Cout, L)       output plane, L = H*(W+2) flattened spatial
    patch_ref:    (9*Cin_pad, L)        VMEM scratch: per-kd fused-tap im2col slab
    acc_ref:      (Cout, L)             VMEM f32 accumulator
    """
    Wp = W + 2
    L = H * Wp

    # Zero the per-tap channel-padding rows so that (garbage * zero-weight) can never
    # inject NaN/Inf.  Emitted only when Cin is not already a multiple of 8.
    if Cin_pad != Cin:
        zpad = jnp.zeros((Cin_pad - Cin, L), dtype=patch_ref.dtype)
        for t in range(KSIZE * KSIZE):
            patch_ref[t * Cin_pad + Cin:(t + 1) * Cin_pad, :] = zpad

    acc_ref[...] = jnp.zeros_like(acc_ref)

    for kd, x_ref in enumerate((x0_ref, x1_ref, x2_ref)):
        # Assemble the im2col slab for this kd: 9 static lane-offset windows of the flat
        # plane, stacked along the contraction (sublane) axis at 8-aligned offsets.
        for kh in range(KSIZE):
            for kw in range(KSIZE):
                t = kh * KSIZE + kw
                s = kh * Wp + kw
                patch_ref[t * Cin_pad:t * Cin_pad + Cin, :] = x_ref[0, 0, :, s:s + L]
        # One fused-contraction MXU matmul per kd: K = 9*Cin_pad.
        acc_ref[...] += jnp.dot(w_ref[kd], patch_ref[...],
                                preferred_element_type=jnp.float32)

    # Folded-BN bias + LeakyReLU(0.01); epilogue stays f32 and lane-dense.
    y = acc_ref[...] + b_ref[...]
    o_ref[0, 0] = jnp.where(y >= 0.0, y, LEAKY_SLOPE * y).astype(o_ref.dtype)


@functools.partial(jax.jit, static_argnames=("compute_dtype",))
def conv_bn_relu_3d(x_ncdhw, weight, gamma, beta, running_mean, running_var,
                    eps=1e-5, compute_dtype=jnp.float32):
    """x_ncdhw: (N, Cin, D, H, W); weight: (Cout, Cin, 3, 3, 3) (PyTorch order)."""
    N, Cin, D, H, W = x_ncdhw.shape
    Cout = weight.shape[0]
    Wp = W + 2
    S = (H + 3) * Wp     # padded plane, flattened (extra H pad row keeps the max tap
                         # window, lane shift 2*Wp + 2, in bounds)
    L = H * Wp           # flattened output columns (2 discarded pad columns per row)
    Cin_pad = _round_up(Cin, 8)

    # ---- BN (inference) folding: scale into the conv weights, bias kept separate ----
    inv_std = gamma / jnp.sqrt(running_var + eps)
    bias = (beta - running_mean * inv_std).astype(jnp.float32).reshape(Cout, 1)
    w_folded = weight * inv_std[:, None, None, None, None]
    # (Cout, Cin, kd, kh, kw) -> (kd, Cout, kh, kw, ci) -> zero-pad ci to Cin_pad
    # -> (kd, Cout, 9*Cin_pad): one dense 2-D operand per kd, K order (kh, kw, ci_pad).
    w2 = jnp.transpose(w_folded, (2, 0, 3, 4, 1))
    w2 = jnp.pad(w2, ((0, 0), (0, 0), (0, 0), (0, 0), (0, Cin_pad - Cin)))
    w2 = w2.reshape(KSIZE, Cout, KSIZE * KSIZE * Cin_pad).astype(compute_dtype)

    # ---- input: spatial halo pad + channels-adjacent-to-plane layout ----
    # TODO(synk): this pad+transpose costs one extra HBM round-trip of the input; it could
    # be removed by handling the halo with in-kernel DMAs from a pl.ANY input.
    xp = jnp.pad(x_ncdhw.astype(compute_dtype),
                 ((0, 0), (0, 0), (1, 1), (1, 2), (1, 1)))
    xp = jnp.transpose(xp, (0, 2, 1, 3, 4)).reshape(N, D + 2, Cin, S)

    kernel = functools.partial(_conv_bn_lrelu_plane_kernel,
                               H=H, W=W, Cin=Cin, Cin_pad=Cin_pad)

    out = pl.pallas_call(
        kernel,
        out_shape=jax.ShapeDtypeStruct((N, D, Cout, L), jnp.float32),
        grid_spec=pltpu.PrefetchScalarGridSpec(
            num_scalar_prefetch=0,
            grid=(N, D),
            in_specs=[
                # padded input depth-planes d, d+1, d+2 (same array, three windows)
                pl.BlockSpec((1, 1, Cin, S), lambda n, d: (n, d, 0, 0)),
                pl.BlockSpec((1, 1, Cin, S), lambda n, d: (n, d + 1, 0, 0)),
                pl.BlockSpec((1, 1, Cin, S), lambda n, d: (n, d + 2, 0, 0)),
                # dense, VMEM-resident weights and bias
                pl.BlockSpec((KSIZE, Cout, KSIZE * KSIZE * Cin_pad),
                             lambda n, d: (0, 0, 0)),
                pl.BlockSpec((Cout, 1), lambda n, d: (0, 0)),
            ],
            out_specs=pl.BlockSpec((1, 1, Cout, L), lambda n, d: (n, d, 0, 0)),
            scratch_shapes=[
                pltpu.VMEM((KSIZE * KSIZE * Cin_pad, L), compute_dtype),  # patch slab
                pltpu.VMEM((Cout, L), jnp.float32),                       # accumulator
            ],
        ),
        compiler_params=pltpu.CompilerParams(
            dimension_semantics=("parallel", "parallel"),
            vmem_limit_bytes=48 * 1024 * 1024,
        ),
    )(xp, xp, xp, w2, bias)

    # drop the 2 pad columns per row; back to PyTorch NCDHW
    out = out.reshape(N, D, Cout, H, Wp)[..., :W]
    return jnp.transpose(out, (0, 2, 1, 3, 4)).astype(x_ncdhw.dtype)


def _reference(x_ncdhw, weight, gamma, beta, running_mean, running_var, eps=1e-5):
    """Pure-JAX reference (conv_general_dilated) for correctness check."""
    x = jnp.transpose(x_ncdhw, (0, 2, 3, 4, 1))                  # NDHWC
    w = jnp.transpose(weight, (2, 3, 4, 1, 0))                   # DHWIO
    y = jax.lax.conv_general_dilated(
        x, w, window_strides=(1, 1, 1), padding=((1, 1), (1, 1), (1, 1)),
        dimension_numbers=("NDHWC", "DHWIO", "NDHWC"))
    scale = gamma / jnp.sqrt(running_var + eps)
    bias = beta - running_mean * scale
    y = y * scale + bias
    y = jnp.where(y >= 0.0, y, LEAKY_SLOPE * y)
    return jnp.transpose(y, (0, 4, 1, 2, 3))


if __name__ == "__main__":
    key = jax.random.PRNGKey(0)
    k_x, k_w, k_g, k_b, k_m, k_v = jax.random.split(key, 6)

    N, Cin, Cout = 2, 4, 8
    D = H = W = 8

    x = jax.random.normal(k_x, (N, Cin, D, H, W), jnp.float32)
    weight = 0.1 * jax.random.normal(k_w, (Cout, Cin, KSIZE, KSIZE, KSIZE),
                                     jnp.float32)
    gamma = 1.0 + 0.1 * jax.random.normal(k_g, (Cout,), jnp.float32)
    beta = 0.1 * jax.random.normal(k_b, (Cout,), jnp.float32)
    running_mean = 0.1 * jax.random.normal(k_m, (Cout,), jnp.float32)
    running_var = jnp.abs(1.0 + 0.1 * jax.random.normal(k_v, (Cout,),
                                                        jnp.float32))

    ref = _reference(x, weight, gamma, beta, running_mean, running_var)

    out = conv_bn_relu_3d(x, weight, gamma, beta, running_mean, running_var)
    out = jax.block_until_ready(out)
    assert out.shape == (N, Cout, D, H, W), out.shape
    assert jnp.allclose(out, ref, atol=1e-4, rtol=1e-4), (
        float(jnp.max(jnp.abs(out - ref))))

    print("KERNEL_OK")
</pallas_src>

<mosaic_0001>
module attributes {stable_mosaic.version = 11 : i64} {
  func.func @_conv_bn_lrelu_plane_kernel(%arg0: i32, %arg1: i32, %arg2: memref<1x1x4x110xf32, #tpu.memory_space<vmem>>, %arg3: memref<1x1x4x110xf32, #tpu.memory_space<vmem>>, %arg4: memref<1x1x4x110xf32, #tpu.memory_space<vmem>>, %arg5: memref<3x8x72xf32, #tpu.memory_space<vmem>>, %arg6: memref<8x1xf32, #tpu.memory_space<vmem>>, %arg7: memref<1x1x8x80xf32, #tpu.memory_space<vmem>>, %arg8: memref<72x80xf32, #tpu.memory_space<vmem>>, %arg9: memref<8x80xf32, #tpu.memory_space<vmem>>) attributes {dimension_semantics = [#tpu.dimension_semantics<parallel>, #tpu.dimension_semantics<parallel>], iteration_bounds = array<i64: 2, 8>, scalar_prefetch = 0 : i64, scratch_operands = 2 : i64, tpu.core_type = #tpu.core_type<tc>, window_params = [{transform_indices = @transform_0, window_bounds = array<i64: 1, 1, 4, 110>}, {transform_indices = @transform_1, window_bounds = array<i64: 1, 1, 4, 110>}, {transform_indices = @transform_2, window_bounds = array<i64: 1, 1, 4, 110>}, {pipeline_mode = #tpu.pipeline_mode<synchronous>, transform_indices = @transform_3, window_bounds = array<i64: 3, 8, 72>}, {pipeline_mode = #tpu.pipeline_mode<synchronous>, transform_indices = @transform_4, window_bounds = array<i64: 8, 1>}, {transform_indices = @transform_5, window_bounds = array<i64: 1, 1, 8, 80>}]} {
    %cst = arith.constant 0.000000e+00 : f32
    %0 = vector.broadcast %cst : f32 to vector<4x80xf32>
    %c4 = arith.constant 4 : index
    %c0 = arith.constant 0 : index
    %1 = vector.load %arg8[%c4, %c0] : memref<72x80xf32, #tpu.memory_space<vmem>>, vector<4x80xf32>
    tpu.vector_store %arg8[%c4, %c0], %0 {strides = array<i32>} : memref<72x80xf32, #tpu.memory_space<vmem>>, vector<4x80xf32>,
    %c12 = arith.constant 12 : index
    %c0_0 = arith.constant 0 : index
    %2 = vector.load %arg8[%c12, %c0_0] : memref<72x80xf32, #tpu.memory_space<vmem>>, vector<4x80xf32>
    tpu.vector_store %arg8[%c12, %c0_0], %0 {strides = array<i32>} : memref<72x80xf32, #tpu.memory_space<vmem>>, vector<4x80xf32>,
    %c20 = arith.constant 20 : index
    %c0_1 = arith.constant 0 : index
    %3 = vector.load %arg8[%c20, %c0_1] : memref<72x80xf32, #tpu.memory_space<vmem>>, vector<4x80xf32>
    tpu.vector_store %arg8[%c20, %c0_1], %0 {strides = array<i32>} : memref<72x80xf32, #tpu.memory_space<vmem>>, vector<4x80xf32>,
    %c28 = arith.constant 28 : index
    %c0_2 = arith.constant 0 : index
    %4 = vector.load %arg8[%c28, %c0_2] : memref<72x80xf32, #tpu.memory_space<vmem>>, vector<4x80xf32>
    tpu.vector_store %arg8[%c28, %c0_2], %0 {strides = array<i32>} : memref<72x80xf32, #tpu.memory_space<vmem>>, vector<4x80xf32>,
    %c36 = arith.constant 36 : index
    %c0_3 = arith.constant 0 : index
    %5 = vector.load %arg8[%c36, %c0_3] : memref<72x80xf32, #tpu.memory_space<vmem>>, vector<4x80xf32>
    tpu.vector_store %arg8[%c36, %c0_3], %0 {strides = array<i32>} : memref<72x80xf32, #tpu.memory_space<vmem>>, vector<4x80xf32>,
    %c44 = arith.constant 44 : index
    %c0_4 = arith.constant 0 : index
    %6 = vector.load %arg8[%c44, %c0_4] : memref<72x80xf32, #tpu.memory_space<vmem>>, vector<4x80xf32>
    tpu.vector_store %arg8[%c44, %c0_4], %0 {strides = array<i32>} : memref<72x80xf32, #tpu.memory_space<vmem>>, vector<4x80xf32>,
    %c52 = arith.constant 52 : index
    %c0_5 = arith.constant 0 : index
    %7 = vector.load %arg8[%c52, %c0_5] : memref<72x80xf32, #tpu.memory_space<vmem>>, vector<4x80xf32>
    tpu.vector_store %arg8[%c52, %c0_5], %0 {strides = array<i32>} : memref<72x80xf32, #tpu.memory_space<vmem>>, vector<4x80xf32>,
    %c60 = arith.constant 60 : index
    %c0_6 = arith.constant 0 : index
    %8 = vector.load %arg8[%c60, %c0_6] : memref<72x80xf32, #tpu.memory_space<vmem>>, vector<4x80xf32>
    tpu.vector_store %arg8[%c60, %c0_6], %0 {strides = array<i32>} : memref<72x80xf32, #tpu.memory_space<vmem>>, vector<4x80xf32>,
    %c68 = arith.constant 68 : index
    %c0_7 = arith.constant 0 : index
    %9 = vector.load %arg8[%c68, %c0_7] : memref<72x80xf32, #tpu.memory_space<vmem>>, vector<4x80xf32>
    tpu.vector_store %arg8[%c68, %c0_7], %0 {strides = array<i32>} : memref<72x80xf32, #tpu.memory_space<vmem>>, vector<4x80xf32>,
    %cst_8 = arith.constant 0.000000e+00 : f32
    %10 = vector.broadcast %cst_8 : f32 to vector<8x80xf32>
    %c0_9 = arith.constant 0 : index
    %c0_10 = arith.constant 0 : index
    %11 = vector.load %arg9[%c0_9, %c0_10] : memref<8x80xf32, #tpu.memory_space<vmem>>, vector<8x80xf32>
    tpu.vector_store %arg9[%c0_9, %c0_10], %10 {strides = array<i32>} : memref<8x80xf32, #tpu.memory_space<vmem>>, vector<8x80xf32>,
    %c0_11 = arith.constant 0 : index
    %c0_12 = arith.constant 0 : index
    %c0_13 = arith.constant 0 : index
    %c0_14 = arith.constant 0 : index
    %12 = vector.load %arg2[%c0_11, %c0_12, %c0_13, %c0_14] : memref<1x1x4x110xf32, #tpu.memory_space<vmem>>, vector<1x1x4x80xf32>
    %13 = vector.shape_cast %12 : vector<1x1x4x80xf32> to vector<4x80xf32>
    %c0_15 = arith.constant 0 : index
    %c0_16 = arith.constant 0 : index
    %14 = vector.load %arg8[%c0_15, %c0_16] : memref<72x80xf32, #tpu.memory_space<vmem>>, vector<4x80xf32>
    tpu.vector_store %arg8[%c0_15, %c0_16], %13 {strides = array<i32>} : memref<72x80xf32, #tpu.memory_space<vmem>>, vector<4x80xf32>,
    %c0_17 = arith.constant 0 : index
    %c0_18 = arith.constant 0 : index
    %c0_19 = arith.constant 0 : index
    %c1 = arith.constant 1 : index
    %15 = vector.load %arg2[%c0_17, %c0_18, %c0_19, %c1] : memref<1x1x4x110xf32, #tpu.memory_space<vmem>>, vector<1x1x4x80xf32>
    %16 = vector.shape_cast %15 : vector<1x1x4x80xf32> to vector<4x80xf32>
    %c8 = arith.constant 8 : index
    %c0_20 = arith.constant 0 : index
    %17 = vector.load %arg8[%c8, %c0_20] : memref<72x80xf32, #tpu.memory_space<vmem>>, vector<4x80xf32>
    tpu.vector_store %arg8[%c8, %c0_20], %16 {strides = array<i32>} : memref<72x80xf32, #tpu.memory_space<vmem>>, vector<4x80xf32>,
    %c0_21 = arith.constant 0 : index
    %c0_22 = arith.constant 0 : index
    %c0_23 = arith.constant 0 : index
    %c2 = arith.constant 2 : index
    %18 = vector.load %arg2[%c0_21, %c0_22, %c0_23, %c2] : memref<1x1x4x110xf32, #tpu.memory_space<vmem>>, vector<1x1x4x80xf32>
    %19 = vector.shape_cast %18 : vector<1x1x4x80xf32> to vector<4x80xf32>
    %c16 = arith.constant 16 : index
    %c0_24 = arith.constant 0 : index
    %20 = vector.load %arg8[%c16, %c0_24] : memref<72x80xf32, #tpu.memory_space<vmem>>, vector<4x80xf32>
    tpu.vector_store %arg8[%c16, %c0_24], %19 {strides = array<i32>} : memref<72x80xf32, #tpu.memory_space<vmem>>, vector<4x80xf32>,
    %c0_25 = arith.constant 0 : index
    %c0_26 = arith.constant 0 : index
    %c0_27 = arith.constant 0 : index
    %c10 = arith.constant 10 : index
    %21 = vector.load %arg2[%c0_25, %c0_26, %c0_27, %c10] : memref<1x1x4x110xf32, #tpu.memory_space<vmem>>, vector<1x1x4x80xf32>
    %22 = vector.shape_cast %21 : vector<1x1x4x80xf32> to vector<4x80xf32>
    %c24 = arith.constant 24 : index
    %c0_28 = arith.constant 0 : index
    %23 = vector.load %arg8[%c24, %c0_28] : memref<72x80xf32, #tpu.memory_space<vmem>>, vector<4x80xf32>
    tpu.vector_store %arg8[%c24, %c0_28], %22 {strides = array<i32>} : memref<72x80xf32, #tpu.memory_space<vmem>>, vector<4x80xf32>,
    %c0_29 = arith.constant 0 : index
    %c0_30 = arith.constant 0 : index
    %c0_31 = arith.constant 0 : index
    %c11 = arith.constant 11 : index
    %24 = vector.load %arg2[%c0_29, %c0_30, %c0_31, %c11] : memref<1x1x4x110xf32, #tpu.memory_space<vmem>>, vector<1x1x4x80xf32>
    %25 = vector.shape_cast %24 : vector<1x1x4x80xf32> to vector<4x80xf32>
    %c32 = arith.constant 32 : index
    %c0_32 = arith.constant 0 : index
    %26 = vector.load %arg8[%c32, %c0_32] : memref<72x80xf32, #tpu.memory_space<vmem>>, vector<4x80xf32>
    tpu.vector_store %arg8[%c32, %c0_32], %25 {strides = array<i32>} : memref<72x80xf32, #tpu.memory_space<vmem>>, vector<4x80xf32>,
    %c0_33 = arith.constant 0 : index
    %c0_34 = arith.constant 0 : index
    %c0_35 = arith.constant 0 : index
    %c12_36 = arith.constant 12 : index
    %27 = vector.load %arg2[%c0_33, %c0_34, %c0_35, %c12_36] : memref<1x1x4x110xf32, #tpu.memory_space<vmem>>, vector<1x1x4x80xf32>
    %28 = vector.shape_cast %27 : vector<1x1x4x80xf32> to vector<4x80xf32>
    %c40 = arith.constant 40 : index
    %c0_37 = arith.constant 0 : index
    %29 = vector.load %arg8[%c40, %c0_37] : memref<72x80xf32, #tpu.memory_space<vmem>>, vector<4x80xf32>
    tpu.vector_store %arg8[%c40, %c0_37], %28 {strides = array<i32>} : memref<72x80xf32, #tpu.memory_space<vmem>>, vector<4x80xf32>,
    %c0_38 = arith.constant 0 : index
    %c0_39 = arith.constant 0 : index
    %c0_40 = arith.constant 0 : index
    %c20_41 = arith.constant 20 : index
    %30 = vector.load %arg2[%c0_38, %c0_39, %c0_40, %c20_41] : memref<1x1x4x110xf32, #tpu.memory_space<vmem>>, vector<1x1x4x80xf32>
    %31 = vector.shape_cast %30 : vector<1x1x4x80xf32> to vector<4x80xf32>
    %c48 = arith.constant 48 : index
    %c0_42 = arith.constant 0 : index
    %32 = vector.load %arg8[%c48, %c0_42] : memref<72x80xf32, #tpu.memory_space<vmem>>, vector<4x80xf32>
    tpu.vector_store %arg8[%c48, %c0_42], %31 {strides = array<i32>} : memref<72x80xf32, #tpu.memory_space<vmem>>, vector<4x80xf32>,
    %c0_43 = arith.constant 0 : index
    %c0_44 = arith.constant 0 : index
    %c0_45 = arith.constant 0 : index
    %c21 = arith.constant 21 : index
    %33 = vector.load %arg2[%c0_43, %c0_44, %c0_45, %c21] : memref<1x1x4x110xf32, #tpu.memory_space<vmem>>, vector<1x1x4x80xf32>
    %34 = vector.shape_cast %33 : vector<1x1x4x80xf32> to vector<4x80xf32>
    %c56 = arith.constant 56 : index
    %c0_46 = arith.constant 0 : index
    %35 = vector.load %arg8[%c56, %c0_46] : memref<72x80xf32, #tpu.memory_space<vmem>>, vector<4x80xf32>
    tpu.vector_store %arg8[%c56, %c0_46], %34 {strides = array<i32>} : memref<72x80xf32, #tpu.memory_space<vmem>>, vector<4x80xf32>,
    %c0_47 = arith.constant 0 : index
    %c0_48 = arith.constant 0 : index
    %c0_49 = arith.constant 0 : index
    %c22 = arith.constant 22 : index
    %36 = vector.load %arg2[%c0_47, %c0_48, %c0_49, %c22] : memref<1x1x4x110xf32, #tpu.memory_space<vmem>>, vector<1x1x4x80xf32>
    %37 = vector.shape_cast %36 : vector<1x1x4x80xf32> to vector<4x80xf32>
    %c64 = arith.constant 64 : index
    %c0_50 = arith.constant 0 : index
    %38 = vector.load %arg8[%c64, %c0_50] : memref<72x80xf32, #tpu.memory_space<vmem>>, vector<4x80xf32>
    tpu.vector_store %arg8[%c64, %c0_50], %37 {strides = array<i32>} : memref<72x80xf32, #tpu.memory_space<vmem>>, vector<4x80xf32>,
    %c0_51 = arith.constant 0 : index
    %c0_52 = arith.constant 0 : index
    %39 = vector.load %arg9[%c0_51, %c0_52] : memref<8x80xf32, #tpu.memory_space<vmem>>, vector<8x80xf32>
    %c0_53 = arith.constant 0 : index
    %c0_54 = arith.constant 0 : index
    %c0_55 = arith.constant 0 : index
    %40 = vector.load %arg5[%c0_53, %c0_54, %c0_55] : memref<3x8x72xf32, #tpu.memory_space<vmem>>, vector<1x8x72xf32>
    %41 = vector.shape_cast %40 : vector<1x8x72xf32> to vector<8x72xf32>
    %c0_56 = arith.constant 0 : index
    %c0_57 = arith.constant 0 : index
    %42 = vector.load %arg8[%c0_56, %c0_57] : memref<72x80xf32, #tpu.memory_space<vmem>>, vector<72x80xf32>
    %cst_58 = arith.constant dense<0.000000e+00> : vector<8x80xf32>
    %43 = tpu.matmul %41, %42, %cst_58 {dimension_numbers = #tpu.dot_dimension_numbers<[1], [0], [0], [1], [0, 0, 1, 1], [], []>} : vector<8x72xf32>, vector<72x80xf32>, vector<8x80xf32> -> vector<8x80xf32>
    %44 = arith.addf %39, %43 : vector<8x80xf32>
    %c0_59 = arith.constant 0 : index
    %c0_60 = arith.constant 0 : index
    %45 = vector.load %arg9[%c0_59, %c0_60] : memref<8x80xf32, #tpu.memory_space<vmem>>, vector<8x80xf32>
    tpu.vector_store %arg9[%c0_59, %c0_60], %44 {strides = array<i32>} : memref<8x80xf32, #tpu.memory_space<vmem>>, vector<8x80xf32>,
    %c0_61 = arith.constant 0 : index
    %c0_62 = arith.constant 0 : index
    %c0_63 = arith.constant 0 : index
    %c0_64 = arith.constant 0 : index
    %46 = vector.load %arg3[%c0_61, %c0_62, %c0_63, %c0_64] : memref<1x1x4x110xf32, #tpu.memory_space<vmem>>, vector<1x1x4x80xf32>
    %47 = vector.shape_cast %46 : vector<1x1x4x80xf32> to vector<4x80xf32>
    %c0_65 = arith.constant 0 : index
    %c0_66 = arith.constant 0 : index
    %48 = vector.load %arg8[%c0_65, %c0_66] : memref<72x80xf32, #tpu.memory_space<vmem>>, vector<4x80xf32>
    tpu.vector_store %arg8[%c0_65, %c0_66], %47 {strides = array<i32>} : memref<72x80xf32, #tpu.memory_space<vmem>>, vector<4x80xf32>,
    %c0_67 = arith.constant 0 : index
    %c0_68 = arith.constant 0 : index
    %c0_69 = arith.constant 0 : index
    %c1_70 = arith.constant 1 : index
    %49 = vector.load %arg3[%c0_67, %c0_68, %c0_69, %c1_70] : memref<1x1x4x110xf32, #tpu.memory_space<vmem>>, vector<1x1x4x80xf32>
    %50 = vector.shape_cast %49 : vector<1x1x4x80xf32> to vector<4x80xf32>
    %c8_71 = arith.constant 8 : index
    %c0_72 = arith.constant 0 : index
    %51 = vector.load %arg8[%c8_71, %c0_72] : memref<72x80xf32, #tpu.memory_space<vmem>>, vector<4x80xf32>
    tpu.vector_store %arg8[%c8_71, %c0_72], %50 {strides = array<i32>} : memref<72x80xf32, #tpu.memory_space<vmem>>, vector<4x80xf32>,
    %c0_73 = arith.constant 0 : index
    %c0_74 = arith.constant 0 : index
    %c0_75 = arith.constant 0 : index
    %c2_76 = arith.constant 2 : index
    %52 = vector.load %arg3[%c0_73, %c0_74, %c0_75, %c2_76] : memref<1x1x4x110xf32, #tpu.memory_space<vmem>>, vector<1x1x4x80xf32>
    %53 = vector.shape_cast %52 : vector<1x1x4x80xf32> to vector<4x80xf32>
    %c16_77 = arith.constant 16 : index
    %c0_78 = arith.constant 0 : index
    %54 = vector.load %arg8[%c16_77, %c0_78] : memref<72x80xf32, #tpu.memory_space<vmem>>, vector<4x80xf32>
    tpu.vector_store %arg8[%c16_77, %c0_78], %53 {strides = array<i32>} : memref<72x80xf32, #tpu.memory_space<vmem>>, vector<4x80xf32>,
    %c0_79 = arith.constant 0 : index
    %c0_80 = arith.constant 0 : index
    %c0_81 = arith.constant 0 : index
    %c10_82 = arith.constant 10 : index
    %55 = vector.load %arg3[%c0_79, %c0_80, %c0_81, %c10_82] : memref<1x1x4x110xf32, #tpu.memory_space<vmem>>, vector<1x1x4x80xf32>
    %56 = vector.shape_cast %55 : vector<1x1x4x80xf32> to vector<4x80xf32>
    %c24_83 = arith.constant 24 : index
    %c0_84 = arith.constant 0 : index
    %57 = vector.load %arg8[%c24_83, %c0_84] : memref<72x80xf32, #tpu.memory_space<vmem>>, vector<4x80xf32>
    tpu.vector_store %arg8[%c24_83, %c0_84], %56 {strides = array<i32>} : memref<72x80xf32, #tpu.memory_space<vmem>>, vector<4x80xf32>,
    %c0_85 = arith.constant 0 : index
    %c0_86 = arith.constant 0 : index
    %c0_87 = arith.constant 0 : index
    %c11_88 = arith.constant 11 : index
    %58 = vector.load %arg3[%c0_85, %c0_86, %c0_87, %c11_88] : memref<1x1x4x110xf32, #tpu.memory_space<vmem>>, vector<1x1x4x80xf32>
    %59 = vector.shape_cast %58 : vector<1x1x4x80xf32> to vector<4x80xf32>
    %c32_89 = arith.constant 32 : index
    %c0_90 = arith.constant 0 : index
    %60 = vector.load %arg8[%c32_89, %c0_90] : memref<72x80xf32, #tpu.memory_space<vmem>>, vector<4x80xf32>
    tpu.vector_store %arg8[%c32_89, %c0_90], %59 {strides = array<i32>} : memref<72x80xf32, #tpu.memory_space<vmem>>, vector<4x80xf32>,
    %c0_91 = arith.constant 0 : index
    %c0_92 = arith.constant 0 : index
    %c0_93 = arith.constant 0 : index
    %c12_94 = arith.constant 12 : index
    %61 = vector.load %arg3[%c0_91, %c0_92, %c0_93, %c12_94] : memref<1x1x4x110xf32, #tpu.memory_space<vmem>>, vector<1x1x4x80xf32>
    %62 = vector.shape_cast %61 : vector<1x1x4x80xf32> to vector<4x80xf32>
    %c40_95 = arith.constant 40 : index
    %c0_96 = arith.constant 0 : index
    %63 = vector.load %arg8[%c40_95, %c0_96] : memref<72x80xf32, #tpu.memory_space<vmem>>, vector<4x80xf32>
    tpu.vector_store %arg8[%c40_95, %c0_96], %62 {strides = array<i32>} : memref<72x80xf32, #tpu.memory_space<vmem>>, vector<4x80xf32>,
    %c0_97 = arith.constant 0 : index
    %c0_98 = arith.constant 0 : index
    %c0_99 = arith.constant 0 : index
    %c20_100 = arith.constant 20 : index
    %64 = vector.load %arg3[%c0_97, %c0_98, %c0_99, %c20_100] : memref<1x1x4x110xf32, #tpu.memory_space<vmem>>, vector<1x1x4x80xf32>
    %65 = vector.shape_cast %64 : vector<1x1x4x80xf32> to vector<4x80xf32>
    %c48_101 = arith.constant 48 : index
    %c0_102 = arith.constant 0 : index
    %66 = vector.load %arg8[%c48_101, %c0_102] : memref<72x80xf32, #tpu.memory_space<vmem>>, vector<4x80xf32>
    tpu.vector_store %arg8[%c48_101, %c0_102], %65 {strides = array<i32>} : memref<72x80xf32, #tpu.memory_space<vmem>>, vector<4x80xf32>,
    %c0_103 = arith.constant 0 : index
    %c0_104 = arith.constant 0 : index
    %c0_105 = arith.constant 0 : index
    %c21_106 = arith.constant 21 : index
    %67 = vector.load %arg3[%c0_103, %c0_104, %c0_105, %c21_106] : memref<1x1x4x110xf32, #tpu.memory_space<vmem>>, vector<1x1x4x80xf32>
    %68 = vector.shape_cast %67 : vector<1x1x4x80xf32> to vector<4x80xf32>
    %c56_107 = arith.constant 56 : index
    %c0_108 = arith.constant 0 : index
    %69 = vector.load %arg8[%c56_107, %c0_108] : memref<72x80xf32, #tpu.memory_space<vmem>>, vector<4x80xf32>
    tpu.vector_store %arg8[%c56_107, %c0_108], %68 {strides = array<i32>} : memref<72x80xf32, #tpu.memory_space<vmem>>, vector<4x80xf32>,
    %c0_109 = arith.constant 0 : index
    %c0_110 = arith.constant 0 : index
    %c0_111 = arith.constant 0 : index
    %c22_112 = arith.constant 22 : index
    %70 = vector.load %arg3[%c0_109, %c0_110, %c0_111, %c22_112] : memref<1x1x4x110xf32, #tpu.memory_space<vmem>>, vector<1x1x4x80xf32>
    %71 = vector.shape_cast %70 : vector<1x1x4x80xf32> to vector<4x80xf32>
    %c64_113 = arith.constant 64 : index
    %c0_114 = arith.constant 0 : index
    %72 = vector.load %arg8[%c64_113, %c0_114] : memref<72x80xf32, #tpu.memory_space<vmem>>, vector<4x80xf32>
    tpu.vector_store %arg8[%c64_113, %c0_114], %71 {strides = array<i32>} : memref<72x80xf32, #tpu.memory_space<vmem>>, vector<4x80xf32>,
    %c0_115 = arith.constant 0 : index
    %c0_116 = arith.constant 0 : index
    %73 = vector.load %arg9[%c0_115, %c0_116] : memref<8x80xf32, #tpu.memory_space<vmem>>, vector<8x80xf32>
    %c1_117 = arith.constant 1 : index
    %c0_118 = arith.constant 0 : index
    %c0_119 = arith.constant 0 : index
    %74 = vector.load %arg5[%c1_117, %c0_118, %c0_119] : memref<3x8x72xf32, #tpu.memory_space<vmem>>, vector<1x8x72xf32>
    %75 = vector.shape_cast %74 : vector<1x8x72xf32> to vector<8x72xf32>
    %c0_120 = arith.constant 0 : index
    %c0_121 = arith.constant 0 : index
    %76 = vector.load %arg8[%c0_120, %c0_121] : memref<72x80xf32, #tpu.memory_space<vmem>>, vector<72x80xf32>
    %cst_122 = arith.constant dense<0.000000e+00> : vector<8x80xf32>
    %77 = tpu.matmul %75, %76, %cst_122 {dimension_numbers = #tpu.dot_dimension_numbers<[1], [0], [0], [1], [0, 0, 1, 1], [], []>} : vector<8x72xf32>, vector<72x80xf32>, vector<8x80xf32> -> vector<8x80xf32>
    %78 = arith.addf %73, %77 : vector<8x80xf32>
    %c0_123 = arith.constant 0 : index
    %c0_124 = arith.constant 0 : index
    %79 = vector.load %arg9[%c0_123, %c0_124] : memref<8x80xf32, #tpu.memory_space<vmem>>, vector<8x80xf32>
    tpu.vector_store %arg9[%c0_123, %c0_124], %78 {strides = array<i32>} : memref<8x80xf32, #tpu.memory_space<vmem>>, vector<8x80xf32>,
    %c0_125 = arith.constant 0 : index
    %c0_126 = arith.constant 0 : index
    %c0_127 = arith.constant 0 : index
    %c0_128 = arith.constant 0 : index
    %80 = vector.load %arg4[%c0_125, %c0_126, %c0_127, %c0_128] : memref<1x1x4x110xf32, #tpu.memory_space<vmem>>, vector<1x1x4x80xf32>
    %81 = vector.shape_cast %80 : vector<1x1x4x80xf32> to vector<4x80xf32>
    %c0_129 = arith.constant 0 : index
    %c0_130 = arith.constant 0 : index
    %82 = vector.load %arg8[%c0_129, %c0_130] : memref<72x80xf32, #tpu.memory_space<vmem>>, vector<4x80xf32>
    tpu.vector_store %arg8[%c0_129, %c0_130], %81 {strides = array<i32>} : memref<72x80xf32, #tpu.memory_space<vmem>>, vector<4x80xf32>,
    %c0_131 = arith.constant 0 : index
    %c0_132 = arith.constant 0 : index
    %c0_133 = arith.constant 0 : index
    %c1_134 = arith.constant 1 : index
    %83 = vector.load %arg4[%c0_131, %c0_132, %c0_133, %c1_134] : memref<1x1x4x110xf32, #tpu.memory_space<vmem>>, vector<1x1x4x80xf32>
    %84 = vector.shape_cast %83 : vector<1x1x4x80xf32> to vector<4x80xf32>
    %c8_135 = arith.constant 8 : index
    %c0_136 = arith.constant 0 : index
    %85 = vector.load %arg8[%c8_135, %c0_136] : memref<72x80xf32, #tpu.memory_space<vmem>>, vector<4x80xf32>
    tpu.vector_store %arg8[%c8_135, %c0_136], %84 {strides = array<i32>} : memref<72x80xf32, #tpu.memory_space<vmem>>, vector<4x80xf32>,
    %c0_137 = arith.constant 0 : index
    %c0_138 = arith.constant 0 : index
    %c0_139 = arith.constant 0 : index
    %c2_140 = arith.constant 2 : index
    %86 = vector.load %arg4[%c0_137, %c0_138, %c0_139, %c2_140] : memref<1x1x4x110xf32, #tpu.memory_space<vmem>>, vector<1x1x4x80xf32>
    %87 = vector.shape_cast %86 : vector<1x1x4x80xf32> to vector<4x80xf32>
    %c16_141 = arith.constant 16 : index
    %c0_142 = arith.constant 0 : index
    %88 = vector.load %arg8[%c16_141, %c0_142] : memref<72x80xf32, #tpu.memory_space<vmem>>, vector<4x80xf32>
    tpu.vector_store %arg8[%c16_141, %c0_142], %87 {strides = array<i32>} : memref<72x80xf32, #tpu.memory_space<vmem>>, vector<4x80xf32>,
    %c0_143 = arith.constant 0 : index
    %c0_144 = arith.constant 0 : index
    %c0_145 = arith.constant 0 : index
    %c10_146 = arith.constant 10 : index
    %89 = vector.load %arg4[%c0_143, %c0_144, %c0_145, %c10_146] : memref<1x1x4x110xf32, #tpu.memory_space<vmem>>, vector<1x1x4x80xf32>
    %90 = vector.shape_cast %89 : vector<1x1x4x80xf32> to vector<4x80xf32>
    %c24_147 = arith.constant 24 : index
    %c0_148 = arith.constant 0 : index
    %91 = vector.load %arg8[%c24_147, %c0_148] : memref<72x80xf32, #tpu.memory_space<vmem>>, vector<4x80xf32>
    tpu.vector_store %arg8[%c24_147, %c0_148], %90 {strides = array<i32>} : memref<72x80xf32, #tpu.memory_space<vmem>>, vector<4x80xf32>,
    %c0_149 = arith.constant 0 : index
    %c0_150 = arith.constant 0 : index
    %c0_151 = arith.constant 0 : index
    %c11_152 = arith.constant 11 : index
    %92 = vector.load %arg4[%c0_149, %c0_150, %c0_151, %c11_152] : memref<1x1x4x110xf32, #tpu.memory_space<vmem>>, vector<1x1x4x80xf32>
    %93 = vector.shape_cast %92 : vector<1x1x4x80xf32> to vector<4x80xf32>
    %c32_153 = arith.constant 32 : index
    %c0_154 = arith.constant 0 : index
    %94 = vector.load %arg8[%c32_153, %c0_154] : memref<72x80xf32, #tpu.memory_space<vmem>>, vector<4x80xf32>
    tpu.vector_store %arg8[%c32_153, %c0_154], %93 {strides = array<i32>} : memref<72x80xf32, #tpu.memory_space<vmem>>, vector<4x80xf32>,
    %c0_155 = arith.constant 0 : index
    %c0_156 = arith.constant 0 : index
    %c0_157 = arith.constant 0 : index
    %c12_158 = arith.constant 12 : index
    %95 = vector.load %arg4[%c0_155, %c0_156, %c0_157, %c12_158] : memref<1x1x4x110xf32, #tpu.memory_space<vmem>>, vector<1x1x4x80xf32>
    %96 = vector.shape_cast %95 : vector<1x1x4x80xf32> to vector<4x80xf32>
    %c40_159 = arith.constant 40 : index
    %c0_160 = arith.constant 0 : index
    %97 = vector.load %arg8[%c40_159, %c0_160] : memref<72x80xf32, #tpu.memory_space<vmem>>, vector<4x80xf32>
    tpu.vector_store %arg8[%c40_159, %c0_160], %96 {strides = array<i32>} : memref<72x80xf32, #tpu.memory_space<vmem>>, vector<4x80xf32>,
    %c0_161 = arith.constant 0 : index
    %c0_162 = arith.constant 0 : index
    %c0_163 = arith.constant 0 : index
    %c20_164 = arith.constant 20 : index
    %98 = vector.load %arg4[%c0_161, %c0_162, %c0_163, %c20_164] : memref<1x1x4x110xf32, #tpu.memory_space<vmem>>, vector<1x1x4x80xf32>
    %99 = vector.shape_cast %98 : vector<1x1x4x80xf32> to vector<4x80xf32>
    %c48_165 = arith.constant 48 : index
    %c0_166 = arith.constant 0 : index
    %100 = vector.load %arg8[%c48_165, %c0_166] : memref<72x80xf32, #tpu.memory_space<vmem>>, vector<4x80xf32>
    tpu.vector_store %arg8[%c48_165, %c0_166], %99 {strides = array<i32>} : memref<72x80xf32, #tpu.memory_space<vmem>>, vector<4x80xf32>,
    %c0_167 = arith.constant 0 : index
    %c0_168 = arith.constant 0 : index
    %c0_169 = arith.constant 0 : index
    %c21_170 = arith.constant 21 : index
    %101 = vector.load %arg4[%c0_167, %c0_168, %c0_169, %c21_170] : memref<1x1x4x110xf32, #tpu.memory_space<vmem>>, vector<1x1x4x80xf32>
    %102 = vector.shape_cast %101 : vector<1x1x4x80xf32> to vector<4x80xf32>
    %c56_171 = arith.constant 56 : index
    %c0_172 = arith.constant 0 : index
    %103 = vector.load %arg8[%c56_171, %c0_172] : memref<72x80xf32, #tpu.memory_space<vmem>>, vector<4x80xf32>
    tpu.vector_store %arg8[%c56_171, %c0_172], %102 {strides = array<i32>} : memref<72x80xf32, #tpu.memory_space<vmem>>, vector<4x80xf32>,
    %c0_173 = arith.constant 0 : index
    %c0_174 = arith.constant 0 : index
    %c0_175 = arith.constant 0 : index
    %c22_176 = arith.constant 22 : index
    %104 = vector.load %arg4[%c0_173, %c0_174, %c0_175, %c22_176] : memref<1x1x4x110xf32, #tpu.memory_space<vmem>>, vector<1x1x4x80xf32>
    %105 = vector.shape_cast %104 : vector<1x1x4x80xf32> to vector<4x80xf32>
    %c64_177 = arith.constant 64 : index
    %c0_178 = arith.constant 0 : index
    %106 = vector.load %arg8[%c64_177, %c0_178] : memref<72x80xf32, #tpu.memory_space<vmem>>, vector<4x80xf32>
    tpu.vector_store %arg8[%c64_177, %c0_178], %105 {strides = array<i32>} : memref<72x80xf32, #tpu.memory_space<vmem>>, vector<4x80xf32>,
    %c0_179 = arith.constant 0 : index
    %c0_180 = arith.constant 0 : index
    %107 = vector.load %arg9[%c0_179, %c0_180] : memref<8x80xf32, #tpu.memory_space<vmem>>, vector<8x80xf32>
    %c2_181 = arith.constant 2 : index
    %c0_182 = arith.constant 0 : index
    %c0_183 = arith.constant 0 : index
    %108 = vector.load %arg5[%c2_181, %c0_182, %c0_183] : memref<3x8x72xf32, #tpu.memory_space<vmem>>, vector<1x8x72xf32>
    %109 = vector.shape_cast %108 : vector<1x8x72xf32> to vector<8x72xf32>
    %c0_184 = arith.constant 0 : index
    %c0_185 = arith.constant 0 : index
    %110 = vector.load %arg8[%c0_184, %c0_185] : memref<72x80xf32, #tpu.memory_space<vmem>>, vector<72x80xf32>
    %cst_186 = arith.constant dense<0.000000e+00> : vector<8x80xf32>
    %111 = tpu.matmul %109, %110, %cst_186 {dimension_numbers = #tpu.dot_dimension_numbers<[1], [0], [0], [1], [0, 0, 1, 1], [], []>} : vector<8x72xf32>, vector<72x80xf32>, vector<8x80xf32> -> vector<8x80xf32>
    %112 = arith.addf %107, %111 : vector<8x80xf32>
    %c0_187 = arith.constant 0 : index
    %c0_188 = arith.constant 0 : index
    %113 = vector.load %arg9[%c0_187, %c0_188] : memref<8x80xf32, #tpu.memory_space<vmem>>, vector<8x80xf32>
    tpu.vector_store %arg9[%c0_187, %c0_188], %112 {strides = array<i32>} : memref<8x80xf32, #tpu.memory_space<vmem>>, vector<8x80xf32>,
    %c0_189 = arith.constant 0 : index
    %c0_190 = arith.constant 0 : index
    %114 = vector.load %arg9[%c0_189, %c0_190] : memref<8x80xf32, #tpu.memory_space<vmem>>, vector<8x80xf32>
    %c0_191 = arith.constant 0 : index
    %c0_192 = arith.constant 0 : index
    %115 = vector.load %arg6[%c0_191, %c0_192] : memref<8x1xf32, #tpu.memory_space<vmem>>, vector<8x1xf32>
    %116 = vector.broadcast %115 : vector<8x1xf32> to vector<8x80xf32>
    %117 = arith.addf %114, %116 : vector<8x80xf32>
    %cst_193 = arith.constant 0.000000e+00 : f32
    %118 = vector.broadcast %cst_193 : f32 to vector<8x80xf32>
    %119 = arith.cmpf oge, %117, %118 : vector<8x80xf32>
    %cst_194 = arith.constant 0.00999999977 : f32
    %120 = vector.broadcast %cst_194 : f32 to vector<8x80xf32>
    %121 = arith.mulf %120, %117 : vector<8x80xf32>
    %122 = arith.select %119, %117, %121 : vector<8x80xi1>, vector<8x80xf32>
    %c0_195 = arith.constant 0 : index
    %c0_196 = arith.constant 0 : index
    %c0_197 = arith.constant 0 : index
    %c0_198 = arith.constant 0 : index
    %123 = vector.load %arg7[%c0_195, %c0_196, %c0_197, %c0_198] : memref<1x1x8x80xf32, #tpu.memory_space<vmem>>, vector<1x1x8x80xf32>
    %124 = vector.shape_cast %123 : vector<1x1x8x80xf32> to vector<8x80xf32>
    %125 = vector.shape_cast %122 : vector<8x80xf32> to vector<1x1x8x80xf32>
    tpu.vector_store %arg7[%c0_195, %c0_196, %c0_197, %c0_198], %125 {strides = array<i32>} : memref<1x1x8x80xf32, #tpu.memory_space<vmem>>, vector<1x1x8x80xf32>,
    return
  }
  func.func @transform_0(%arg0: i32, %arg1: i32) -> (i32, i32, i32, i32) {
    %c0_i32 = arith.constant 0 : i32
    %c0_i32_0 = arith.constant 0 : i32
    %c0_i32_1 = arith.constant 0 : i32
    return %arg0, %arg1, %c0_i32, %c0_i32_0 : i32, i32, i32, i32
  }
  func.func @transform_1(%arg0: i32, %arg1: i32) -> (i32, i32, i32, i32) {
    %c1_i32 = arith.constant 1 : i32
    %0 = arith.addi %arg1, %c1_i32 : i32
    %c0_i32 = arith.constant 0 : i32
    %c0_i32_0 = arith.constant 0 : i32
    %c0_i32_1 = arith.constant 0 : i32
    return %arg0, %0, %c0_i32, %c0_i32_0 : i32, i32, i32, i32
  }
  func.func @transform_2(%arg0: i32, %arg1: i32) -> (i32, i32, i32, i32) {
    %c2_i32 = arith.constant 2 : i32
    %0 = arith.addi %arg1, %c2_i32 : i32
    %c0_i32 = arith.constant 0 : i32
    %c0_i32_0 = arith.constant 0 : i32
    %c0_i32_1 = arith.constant 0 : i32
    return %arg0, %0, %c0_i32, %c0_i32_0 : i32, i32, i32, i32
  }
  func.func @transform_3(%arg0: i32, %arg1: i32) -> (i32, i32, i32) {
    %c0_i32 = arith.constant 0 : i32
    %c0_i32_0 = arith.constant 0 : i32
    %c0_i32_1 = arith.constant 0 : i32
    %c0_i32_2 = arith.constant 0 : i32
    return %c0_i32, %c0_i32_0, %c0_i32_1 : i32, i32, i32
  }
  func.func @transform_4(%arg0: i32, %arg1: i32) -> (i32, i32) {
    %c0_i32 = arith.constant 0 : i32
    %c0_i32_0 = arith.constant 0 : i32
    %c0_i32_1 = arith.constant 0 : i32
    return %c0_i32, %c0_i32_0 : i32, i32
  }
  func.func @transform_5(%arg0: i32, %arg1: i32) -> (i32, i32, i32, i32) {
    %c0_i32 = arith.constant 0 : i32
    %c0_i32_0 = arith.constant 0 : i32
    %c0_i32_1 = arith.constant 0 : i32
    return %arg0, %arg1, %c0_i32, %c0_i32_0 : i32, i32, i32, i32
  }
}

</mosaic_0001>

<llo_original>
// kernel: conv_bn_relu_3d.1
$region0: #{conv_bn_relu_3d.1}
  #allocation0 [shape = 'u32[]', space=smem, size = 0x4, offset = 0x4, fixed_abs, tag = 'smem constant byte address 0x4 - core index']
  #allocation1 [shape = 'u32[144,128]{1,0:T(1,128)}', space=vmem, size = 0x12000, scoped, tag = 'internal scratch']
  #allocation2 [shape = 'f32[72,80]{1,0:T(8,128)}', space=vmem, size = 0x9000, scoped, tag = 'scratch operand']
  #allocation3 [shape = 'f32[8,80]{1,0:T(8,128)}', space=vmem, size = 0x1000, scoped, tag = 'scratch operand']
  %s0 = inlined_call_operand.vmem [shape: f32[2,10,4,110], index: 0, kind: input, shape index: {}, may-alias: {0,1,2}]
  %s1 = inlined_call_operand.vmem [shape: f32[2,10,4,110], index: 1, kind: input, shape index: {}, may-alias: {0,1,2}]
  %s2 = inlined_call_operand.vmem [shape: f32[2,10,4,110], index: 2, kind: input, shape index: {}, may-alias: {0,1,2}]
  %s3 = inlined_call_operand.vmem [shape: f32[3,8,72], index: 3, kind: input, shape index: {}]
  %s4 = inlined_call_operand.vmem [shape: f32[8,1], index: 4, kind: input, shape index: {}]
  %s5 = inlined_call_operand.vmem [shape: f32[2,8,8,80], index: 5, kind: output, shape index: {}]
  %s6 = sld [smem:[#allocation0]]
  $region53: #{conv_bn_relu_3d.1} parent=0
    _
  %s8 = ssub.s32 1, %s6
  %s9 = scalar_select 0, %s8, %s6
  loop: start=0, step=1, limit=18
  $region2: #{conv_bn_relu_3d.1} parent=0 // loop_pre_header
    _
  $region3: #{conv_bn_relu_3d.1} parent=0 // loop_header
    %s11 = sphi 0, %s15
    %p12 = scmp.ge.s32.totalorder %s11, 18
    %s18 = sphi 0, %s30
    %s19 = sphi 0, %s26
    %s20 = sphi 0, %s18
    %s21 = sphi 0, %s19
    %s22 = sphi 0, %s20
    %s23 = sphi 0, %s21
    %s35 = sphi 0, %s37
    %s38 = sphi 0, %s35
    %s39 = sphi 0, %s38
    %s55 = sphi 0, %s39
    %s65 = sphi 0, %s67
    %s68 = sphi 0, %s65
    %s69 = sphi 0, %s68
    %s85 = sphi 0, %s69
    %s95 = sphi 0, %s97
    %s98 = sphi 0, %s95
    %s99 = sphi 0, %s98
    %s115 = sphi 0, %s99
    %s119 = sphi 0, %s119
    %s121 = sphi 0, %s119
    %s122 = sphi 0, %s121
    %s136 = sphi 0, %s122
    %s140 = sphi 0, %s140
    %s142 = sphi 0, %s140
    %s143 = sphi 0, %s142
    %s157 = sphi 0, %s143
    %s165 = sphi 0, %s167
    %s168 = sphi 0, %s165
    %s169 = sphi 0, %s168
    %s185 = sphi 0, %s169
  $region4: #{conv_bn_relu_3d.1} parent=0 // loop_header_branch
    %14 = sbr.rel (%p12) target = $region8
  $region5: #{conv_bn_relu_3d.1} parent=0 // loop_body
    %s16 = ssub.s32 %s11, 1
    %s17 = ssub.s32 %s11, 2
    %s24 = sadd.s32 1, %s19
    %p25 = scmp.ge.s32.totalorder %s24, 8
    %s26 = scalar_select %p25, 0, %s24
    %s27 = sadd.s32 1, %s18
    %s28 = scalar_select %p25, %s27, %s18
    %p29 = scmp.ge.s32.totalorder %s28, 2
    %s30 = scalar_select %p29, 0, %s28
    %s31 = ssub.s32 %s18, %s30
    %s32 = ssub.s32 %s19, %s26
    %s33 = sor.u32 %s31, %s32
    %p34 = scmp.eq.s32.totalorder %s33, 0
    %s36 = sadd.s32 %s35, 1
    %s37 = scalar_select %p34, %s35, %s36
    %p40 = pneg %p34
    %p41 = scmp.eq.s32.totalorder %s11, 15
    %p42 = por %p40, %p41
    %p43 = scmp.ne.s32.totalorder %s35, %s38
    %p44 = scmp.eq.s32.totalorder %s11, 0
    %p45 = por %p43, %p44
    %p46 = scmp.ne.s32.totalorder %s35, %s38
    %p47 = scmp.eq.s32.totalorder %s16, 15
    %p48 = por %p46, %p47
    %p49 = scmp.ne.s32.totalorder %s38, %s39
    %p50 = scmp.eq.s32.totalorder %s16, 0
    %p51 = por %p49, %p50
    %p52 = scmp.ne.s32.totalorder %s38, %s39
    %p53 = scmp.eq.s32.totalorder %s17, 15
    %p54 = por %p52, %p53
    %p56 = scmp.ne.s32.totalorder %s39, %s55
    %p57 = scmp.eq.s32.totalorder %s17, 0
    %p58 = por %p56, %p57
    %s59 = sadd.s32 %s19, 1
    %s60 = sadd.s32 %s26, 1
    %s61 = ssub.s32 %s18, %s30
    %s62 = ssub.s32 %s59, %s60
    %s63 = sor.u32 %s61, %s62
    %p64 = scmp.eq.s32.totalorder %s63, 0
    %s66 = sadd.s32 %s65, 1
    %s67 = scalar_select %p64, %s65, %s66
    %p70 = pneg %p64
    %p71 = scmp.eq.s32.totalorder %s11, 15
    %p72 = por %p70, %p71
    %p73 = scmp.ne.s32.totalorder %s65, %s68
    %p74 = scmp.eq.s32.totalorder %s11, 0
    %p75 = por %p73, %p74
    %p76 = scmp.ne.s32.totalorder %s65, %s68
    %p77 = scmp.eq.s32.totalorder %s16, 15
    %p78 = por %p76, %p77
    %p79 = scmp.ne.s32.totalorder %s68, %s69
    %p80 = scmp.eq.s32.totalorder %s16, 0
    %p81 = por %p79, %p80
    %p82 = scmp.ne.s32.totalorder %s68, %s69
    %p83 = scmp.eq.s32.totalorder %s17, 15
    %p84 = por %p82, %p83
    %p86 = scmp.ne.s32.totalorder %s69, %s85
    %p87 = scmp.eq.s32.totalorder %s17, 0
    %p88 = por %p86, %p87
    %s89 = sadd.s32 %s19, 2
    %s90 = sadd.s32 %s26, 2
    %s91 = ssub.s32 %s18, %s30
    %s92 = ssub.s32 %s89, %s90
    %s93 = sor.u32 %s91, %s92
    %p94 = scmp.eq.s32.totalorder %s93, 0
    %s96 = sadd.s32 %s95, 1
    %s97 = scalar_select %p94, %s95, %s96
    %p100 = pneg %p94
    %p101 = scmp.eq.s32.totalorder %s11, 15
    %p102 = por %p100, %p101
    %p103 = scmp.ne.s32.totalorder %s95, %s98
    %p104 = scmp.eq.s32.totalorder %s11, 0
    %p105 = por %p103, %p104
    %p106 = scmp.ne.s32.totalorder %s95, %s98
    %p107 = scmp.eq.s32.totalorder %s16, 15
    %p108 = por %p106, %p107
    %p109 = scmp.ne.s32.totalorder %s98, %s99
    %p110 = scmp.eq.s32.totalorder %s16, 0
    %p111 = por %p109, %p110
    %p112 = scmp.ne.s32.totalorder %s98, %s99
    %p113 = scmp.eq.s32.totalorder %s17, 15
    %p114 = por %p112, %p113
    %p116 = scmp.ne.s32.totalorder %s99, %s115
    %p117 = scmp.eq.s32.totalorder %s17, 0
    %p118 = por %p116, %p117
    %s120 = sadd.s32 %s119, 1
    %p123 = scmp.eq.s32.totalorder %s11, 15
    %p124 = scmp.ne.s32.totalorder %s119, %s121
    %p125 = scmp.eq.s32.totalorder %s11, 0
    %p126 = por %p124, %p125
    %p127 = scmp.ne.s32.totalorder %s119, %s121
    %p128 = scmp.eq.s32.totalorder %s16, 15
    %p129 = por %p127, %p128
    %p130 = scmp.ne.s32.totalorder %s121, %s122
    %p131 = scmp.eq.s32.totalorder %s16, 0
    %p132 = por %p130, %p131
    %p133 = scmp.ne.s32.totalorder %s121, %s122
    %p134 = scmp.eq.s32.totalorder %s17, 15
    %p135 = por %p133, %p134
    %p137 = scmp.ne.s32.totalorder %s122, %s136
    %p138 = scmp.eq.s32.totalorder %s17, 0
    %p139 = por %p137, %p138
    %s141 = sadd.s32 %s140, 1
    %p144 = scmp.eq.s32.totalorder %s11, 15
    %p145 = scmp.ne.s32.totalorder %s140, %s142
    %p146 = scmp.eq.s32.totalorder %s11, 0
    %p147 = por %p145, %p146
    %p148 = scmp.ne.s32.totalorder %s140, %s142
    %p149 = scmp.eq.s32.totalorder %s16, 15
    %p150 = por %p148, %p149
    %p151 = scmp.ne.s32.totalorder %s142, %s143
    %p152 = scmp.eq.s32.totalorder %s16, 0
    %p153 = por %p151, %p152
    %p154 = scmp.ne.s32.totalorder %s142, %s143
    %p155 = scmp.eq.s32.totalorder %s17, 15
    %p156 = por %p154, %p155
    %p158 = scmp.ne.s32.totalorder %s143, %s157
    %p159 = scmp.eq.s32.totalorder %s17, 0
    %p160 = por %p158, %p159
    %s161 = ssub.s32 %s18, %s30
    %s162 = ssub.s32 %s19, %s26
    %s163 = sor.u32 %s161, %s162
    %p164 = scmp.eq.s32.totalorder %s163, 0
    %s166 = sadd.s32 %s165, 1
    %s167 = scalar_select %p164, %s165, %s166
    %p170 = pneg %p164
    %p171 = scmp.eq.s32.totalorder %s11, 15
    %p172 = por %p170, %p171
    %p173 = scmp.ne.s32.totalorder %s165, %s168
    %p174 = scmp.eq.s32.totalorder %s11, 0
    %p175 = por %p173, %p174
    %p176 = scmp.ne.s32.totalorder %s165, %s168
    %p177 = scmp.eq.s32.totalorder %s16, 15
    %p178 = por %p176, %p177
    %p179 = scmp.ne.s32.totalorder %s168, %s169
    %p180 = scmp.eq.s32.totalorder %s16, 0
    %p181 = por %p179, %p180
    %p182 = scmp.ne.s32.totalorder %s168, %s169
    %p183 = scmp.eq.s32.totalorder %s17, 15
    %p184 = por %p182, %p183
    %p186 = scmp.ne.s32.totalorder %s169, %s185
    %p187 = scmp.eq.s32.totalorder %s17, 0
    %p188 = por %p186, %p187
    %p189 = scmp.le.s32.totalorder 1, %s11
    %p190 = scmp.lt.s32.totalorder %s11, 17
    %p191 = pnand %p189, %p190
    %p192 = pneg %p191
    // Predicated region
    $region9: #{conv_bn_relu_3d.1} parent=5 // pred_check
      _
    $region10: #{conv_bn_relu_3d.1} parent=5 // pred_check_branch
      %194 = sbr.rel (%p191) target = $region12
    $region11: #{conv_bn_relu_3d.1} parent=5 // pred_region
      %s195 = ssub.s32 %s11, 1
      // Predicated region
      $region13: #{conv_bn_relu_3d.1} parent=11 // pred_check
        %p196 = pneg %p132
      $region14: #{conv_bn_relu_3d.1} parent=11 // pred_check_branch
        %198 = sbr.rel (%p196) target = $region16
      $region15: #{conv_bn_relu_3d.1} parent=11 // pred_region
        _
      $region16: #{conv_bn_relu_3d.1} parent=11 // pred_fallthru
        _
      // Predicated region
      $region17: #{conv_bn_relu_3d.1} parent=11 // pred_check
        %p199 = pneg %p153
      $region18: #{conv_bn_relu_3d.1} parent=11 // pred_check_branch
        %201 = sbr.rel (%p199) target = $region20
      $region19: #{conv_bn_relu_3d.1} parent=11 // pred_region
        _
      $region20: #{conv_bn_relu_3d.1} parent=11 // pred_fallthru
        _
    $region12: #{conv_bn_relu_3d.1} parent=5 // pred_fallthru
      _
    %p202 = scmp.lt.s32.totalorder %s11, 16
    // Predicated region
    $region21: #{conv_bn_relu_3d.1} parent=5 // pred_check
      %p203 = pneg %p202
    $region22: #{conv_bn_relu_3d.1} parent=5 // pred_check_branch
      %205 = sbr.rel (%p203) target = $region24
    $region23: #{conv_bn_relu_3d.1} parent=5 // pred_region
      // Predicated region
      $region25: #{conv_bn_relu_3d.1} parent=23 // pred_check
        %p206 = pneg %p45
      $region26: #{conv_bn_relu_3d.1} parent=23 // pred_check_branch
        %208 = sbr.rel (%p206) target = $region28
      $region27: #{conv_bn_relu_3d.1} parent=23 // pred_region
        %p209 = scmp.lt.s32.totalorder %s18, 1
        %s210 = scalar_select %p209, %s18, 1
        %p211 = scmp.lt.s32.totalorder %s19, 9
        %s212 = scalar_select %p211, %s19, 9
        %s213 = smul.addr %s210, 10
        %s214 = sadd.s32 %s212, %s213
        %s215 = smul.addr %s214, 4
        %s216 = scalar_lea.vmem %s0, %s215
      $region28: #{conv_bn_relu_3d.1} parent=23 // pred_fallthru
        _
      // Predicated region
      $region29: #{conv_bn_relu_3d.1} parent=23 // pred_check
        %p217 = pneg %p75
      $region30: #{conv_bn_relu_3d.1} parent=23 // pred_check_branch
        %219 = sbr.rel (%p217) target = $region32
      $region31: #{conv_bn_relu_3d.1} parent=23 // pred_region
        %s220 = sadd.s32 %s19, 1
        %p221 = scmp.lt.s32.totalorder %s18, 1
        %s222 = scalar_select %p221, %s18, 1
        %p223 = scmp.lt.s32.totalorder %s220, 9
        %s224 = scalar_select %p223, %s220, 9
        %s225 = smul.addr %s222, 10
        %s226 = sadd.s32 %s224, %s225
        %s227 = smul.addr %s226, 4
        %s228 = scalar_lea.vmem %s1, %s227
        %s229 = sadd.s32 %s19, 1
      $region32: #{conv_bn_relu_3d.1} parent=23 // pred_fallthru
        _
      // Predicated region
      $region33: #{conv_bn_relu_3d.1} parent=23 // pred_check
        %p230 = pneg %p105
      $region34: #{conv_bn_relu_3d.1} parent=23 // pred_check_branch
        %232 = sbr.rel (%p230) target = $region36
      $region35: #{conv_bn_relu_3d.1} parent=23 // pred_region
        %s233 = sadd.s32 %s19, 2
        %p234 = scmp.lt.s32.totalorder %s18, 1
        %s235 = scalar_select %p234, %s18, 1
        %p236 = scmp.lt.s32.totalorder %s233, 9
        %s237 = scalar_select %p236, %s233, 9
        %s238 = smul.addr %s235, 10
        %s239 = sadd.s32 %s237, %s238
        %s240 = smul.addr %s239, 4
        %s241 = scalar_lea.vmem %s2, %s240
        %s242 = sadd.s32 %s19, 2
      $region36: #{conv_bn_relu_3d.1} parent=23 // pred_fallthru
        _
    $region24: #{conv_bn_relu_3d.1} parent=5 // pred_fallthru
      _
    %p243 = scmp.le.s32.totalorder 1, %s11
    %p244 = scmp.lt.s32.totalorder %s11, 17
    %p245 = pnand %p243, %p244
    %p246 = pneg %p245
    // Predicated region
    $region37: #{conv_bn_relu_3d.1} parent=5 // pred_check
      _
    $region38: #{conv_bn_relu_3d.1} parent=5 // pred_check_branch
      %248 = sbr.rel (%p245) target = $region40
    $region39: #{conv_bn_relu_3d.1} parent=5 // pred_region
      %s249 = ssub.s32 %s11, 1
      %p250 = scmp.lt.s32.totalorder %s20, 1
      %s251 = scalar_select %p250, %s20, 1
      %p252 = scmp.lt.s32.totalorder %s21, 9
      %s253 = scalar_select %p252, %s21, 9
      %s254 = smul.addr %s251, 10
      %s255 = sadd.s32 %s253, %s254
      %s256 = smul.addr %s255, 4
      %s257 = scalar_lea.vmem %s0, %s256
      %p258 = pneg %p51
      %p259 = pneg %p48
      %s260 = sadd.s32 %s21, 1
      %p261 = scmp.lt.s32.totalorder %s20, 1
      %s262 = scalar_select %p261, %s20, 1
      %p263 = scmp.lt.s32.totalorder %s260, 9
      %s264 = scalar_select %p263, %s260, 9
      %s265 = smul.addr %s262, 10
      %s266 = sadd.s32 %s264, %s265
      %s267 = smul.addr %s266, 4
      %s268 = scalar_lea.vmem %s1, %s267
      %p269 = pneg %p81
      %p270 = pneg %p78
      %s271 = sadd.s32 %s21, 2
      %p272 = scmp.lt.s32.totalorder %s20, 1
      %s273 = scalar_select %p272, %s20, 1
      %p274 = scmp.lt.s32.totalorder %s271, 9
      %s275 = scalar_select %p274, %s271, 9
      %s276 = smul.addr %s273, 10
      %s277 = sadd.s32 %s275, %s276
      %s278 = smul.addr %s277, 4
      %s279 = scalar_lea.vmem %s2, %s278
      %p280 = pneg %p111
      %p281 = pneg %p108
      %p282 = pneg %p132
      %p283 = pneg %p129
      %p284 = pneg %p153
      %p285 = pneg %p150
      %p286 = pneg %p181
      %p287 = pneg %p178
      %p288 = scmp.lt.s32.totalorder %s20, 1
      %s289 = scalar_select %p288, %s20, 1
      %p290 = scmp.lt.s32.totalorder %s21, 7
      %s291 = scalar_select %p290, %s21, 7
      %s292 = smul.addr %s289, 8
      %s293 = sadd.s32 %s291, %s292
      %s294 = smul.addr %s293, 8
      %s295 = scalar_lea.vmem %s5, %s294
      %p296 = scmp.lt.s32.totalorder %s20, 1
      %s297 = scalar_select %p296, %s20, 1
      %p298 = scmp.lt.s32.totalorder %s21, 9
      %s299 = scalar_select %p298, %s21, 9
      %s300 = smul.addr %s297, 10
      %s301 = sadd.s32 %s299, %s300
      %s302 = smul.addr %s301, 4
      %s303 = scalar_lea.vmem %s0, %s302
      %s304 = sadd.s32 %s21, 1
      %p305 = scmp.lt.s32.totalorder %s20, 1
      %s306 = scalar_select %p305, %s20, 1
      %p307 = scmp.lt.s32.totalorder %s304, 9
      %s308 = scalar_select %p307, %s304, 9
      %s309 = smul.addr %s306, 10
      %s310 = sadd.s32 %s308, %s309
      %s311 = smul.addr %s310, 4
      %s312 = scalar_lea.vmem %s1, %s311
      %s313 = sadd.s32 %s21, 1
      %s314 = sadd.s32 %s21, 2
      %p315 = scmp.lt.s32.totalorder %s20, 1
      %s316 = scalar_select %p315, %s20, 1
      %p317 = scmp.lt.s32.totalorder %s314, 9
      %s318 = scalar_select %p317, %s314, 9
      %s319 = smul.addr %s316, 10
      %s320 = sadd.s32 %s318, %s319
      %s321 = smul.addr %s320, 4
      %s322 = scalar_lea.vmem %s2, %s321
      %s323 = sadd.s32 %s21, 2
      %p324 = scmp.lt.s32.totalorder %s20, 1
      %s325 = scalar_select %p324, %s20, 1
      %p326 = scmp.lt.s32.totalorder %s21, 7
      %s327 = scalar_select %p326, %s21, 7
      %s328 = smul.addr %s325, 8
      %s329 = sadd.s32 %s327, %s328
      %s330 = smul.addr %s329, 8
      %s331 = scalar_lea.vmem %s5, %s330
      %vm332 = vcmask 650240
      %333 = vst.msk [vmem:[#allocation2 + $0x4] sm:$0xf] %vm332, 0.0
      %334 = vst.msk [vmem:[#allocation2 + $0xc] sm:$0xf] %vm332, 0.0
      %335 = vst.msk [vmem:[#allocation2 + $0x14] sm:$0xf] %vm332, 0.0
      %336 = vst.msk [vmem:[#allocation2 + $0x1c] sm:$0xf] %vm332, 0.0
      %337 = vst.msk [vmem:[#allocation2 + $0x24] sm:$0xf] %vm332, 0.0
      %338 = vst.msk [vmem:[#allocation2 + $0x2c] sm:$0xf] %vm332, 0.0
      %339 = vst.msk [vmem:[#allocation2 + $0x34] sm:$0xf] %vm332, 0.0
      %340 = vst.msk [vmem:[#allocation2 + $0x3c] sm:$0xf] %vm332, 0.0
      %341 = vst.msk [vmem:[#allocation2 + $0x44] sm:$0xf] %vm332, 0.0
      %vm342 = vcmask 654336
      %343 = vst.msk [vmem:[#allocation3] sm:$0xff] %vm342, 0.0
      %v344 = vld [vmem:[%s303] sm:$0xf]
      %345 = vst.msk [vmem:[#allocation2] sm:$0xf] %vm332, %v344
      %v346 = vld [vmem:[%s303] sm:$0xf]
      %348 = vrot.lane.b32.xlu0 %v346, 127
      %v349 = vpop.permute.xlu0 %348
      %351 = vst.msk [vmem:[#allocation2 + $0x8] sm:$0xf] %vm332, %v349
      %v352 = vld [vmem:[%s303] sm:$0xf]
      %354 = vrot.lane.b32.xlu0 %v352, 126
      %v355 = vpop.permute.xlu0 %354
      %357 = vst.msk [vmem:[#allocation2 + $0x10] sm:$0xf] %vm332, %v355
      %v358 = vld [vmem:[%s303] sm:$0xf]
      %360 = vrot.lane.b32.xlu0 %v358, 118
      %v361 = vpop.permute.xlu0 %360
      %363 = vst.msk [vmem:[#allocation2 + $0x18] sm:$0xf] %vm332, %v361
      %v364 = vld [vmem:[%s303] sm:$0xf]
      %366 = vrot.lane.b32.xlu0 %v364, 117
      %v367 = vpop.permute.xlu0 %366
      %369 = vst.msk [vmem:[#allocation2 + $0x20] sm:$0xf] %vm332, %v367
      %v370 = vld [vmem:[%s303] sm:$0xf]
      %372 = vrot.lane.b32.xlu0 %v370, 116
      %v373 = vpop.permute.xlu0 %372
      %375 = vst.msk [vmem:[#allocation2 + $0x28] sm:$0xf] %vm332, %v373
      %v376 = vld [vmem:[%s303] sm:$0xf]
      %378 = vrot.lane.b32.xlu0 %v376, 108
      %v379 = vpop.permute.xlu0 %378
      %381 = vst.msk [vmem:[#allocation2 + $0x30] sm:$0xf] %vm332, %v379
      %v382 = vld [vmem:[%s303] sm:$0xf]
      %384 = vrot.lane.b32.xlu0 %v382, 107
      %v385 = vpop.permute.xlu0 %384
      %387 = vst.msk [vmem:[#allocation2 + $0x38] sm:$0xf] %vm332, %v385
      %v388 = vld [vmem:[%s303] sm:$0xf]
      %390 = vrot.lane.b32.xlu0 %v388, 106
      %v391 = vpop.permute.xlu0 %390
      %393 = vst.msk [vmem:[#allocation2 + $0x40] sm:$0xf] %vm332, %v391
      %v394 = vld [vmem:[#allocation3] sm:$0xff]
      %v395 = vld [vmem:[%s3] sm:$0xff]
      %v396 = vld [vmem:[#allocation2] sm:$0xff]
      %v397 = vld [vmem:[#allocation2 + $0x8] sm:$0xff]
      %v398 = vld [vmem:[#allocation2 + $0x10] sm:$0xff]
      %v399 = vld [vmem:[#allocation2 + $0x18] sm:$0xff]
      %v400 = vld [vmem:[#allocation2 + $0x20] sm:$0xff]
      %v401 = vld [vmem:[#allocation2 + $0x28] sm:$0xff]
      %v402 = vld [vmem:[#allocation2 + $0x30] sm:$0xff]
      %v403 = vld [vmem:[#allocation2 + $0x38] sm:$0xff]
      %v404 = vld [vmem:[#allocation2 + $0x40] sm:$0xff]
      %vm405 = vcmask 588800
      %v407 = vsel %vm405, %v395, 0
      %409 = vmatprep.subr.mxu0 0.0
      %410 = vmatpush1.msra.mxu0 0.0
      %411 = vmatprep.subr.mxu0 0.0
      %412 = vmatpush1.msra.mxu0 0.0
      %413 = vmatprep.subr.mxu0 0.0
      %414 = vmatpush1.msra.mxu0 0.0
      %415 = vmatprep.subr.mxu0 0.0
      %416 = vmatpush1.msra.mxu0 0.0
      %417 = vmatprep.subr.mxu0 0.0
      %418 = vmatpush1.msra.mxu0 0.0
      %419 = vmatprep.subr.mxu0 0.0
      %420 = vmatpush1.msra.mxu0 0.0
      %421 = vmatprep.subr.mxu0 0.0
      %422 = vmatpush1.msra.mxu0 0.0
      %423 = vmatprep.subr.mxu0 0.0
      %424 = vmatpush1.msra.mxu0 %v404
      %425 = vmatprep.subr.mxu0 0.0
      %426 = vmatpush1.msra.mxu0 %v403
      %427 = vmatprep.subr.mxu0 0.0
      %428 = vmatpush1.msra.mxu0 %v402
      %429 = vmatprep.subr.mxu0 0.0
      %430 = vmatpush1.msra.mxu0 %v401
      %431 = vmatprep.subr.mxu0 0.0
      %432 = vmatpush1.msra.mxu0 %v400
      %433 = vmatprep.subr.mxu0 0.0
      %434 = vmatpush1.msra.mxu0 %v399
      %435 = vmatprep.subr.mxu0 0.0
      %436 = vmatpush1.msra.mxu0 %v398
      %437 = vmatprep.subr.mxu0 0.0
      %438 = vmatpush1.msra.mxu0 %v397
      %439 = vmatprep.subr.mxu0 0.0
      %440 = vmatpush1.msra.mxu0 %v396
      %441 = vmatprep.subr.mxu0 0.0
      %442 = vmatpush2.msra.mxu0 0.0
      %443 = vmatprep.subr.mxu0 0.0
      %444 = vmatpush2.msra.mxu0 0.0
      %445 = vmatprep.subr.mxu0 0.0
      %446 = vmatpush2.msra.mxu0 0.0
      %447 = vmatprep.subr.mxu0 0.0
      %448 = vmatpush2.msra.mxu0 0.0
      %449 = vmatprep.subr.mxu0 0.0
      %450 = vmatpush2.msra.mxu0 0.0
      %451 = vmatprep.subr.mxu0 0.0
      %452 = vmatpush2.msra.mxu0 0.0
      %453 = vmatprep.subr.mxu0 0.0
      %454 = vmatpush2.msra.mxu0 0.0
      %455 = vmatprep.subr.mxu0 0.0
      %456 = vmatpush2.msra.mxu0 0.0
      %457 = vmatprep.subr.mxu0 0.0
      %458 = vmatpush2.msra.mxu0 0.0
      %459 = vmatprep.subr.mxu0 0.0
      %460 = vmatpush2.msra.mxu0 0.0
      %461 = vmatprep.subr.mxu0 0.0
      %462 = vmatpush2.msra.mxu0 0.0
      %463 = vmatprep.subr.mxu0 0.0
      %464 = vmatpush2.msra.mxu0 0.0
      %465 = vmatprep.subr.mxu0 0.0
      %466 = vmatpush2.msra.mxu0 0.0
      %467 = vmatprep.subr.mxu0 0.0
      %468 = vmatpush2.msra.mxu0 0.0
      %469 = vmatprep.subr.mxu0 0.0
      %470 = vmatpush2.msra.mxu0 0.0
      %471 = vmatprep.subr.mxu0 0.0
      %472 = vmatpush2.msra.mxu0 0.0
      %473 = vmatprep.mubr.f32.mxu0 0.0
      %474 = vmatmul.mubr.f32.gmra.mxu0 %v407
      %v475 = vpop.f32.mrf.mxu0
      %v476 = vadd.f32 0.0, %v475
      %v477 = vpop.f32.mrf.mxu0
      %478 = vdwg.mxu0
      %v479 = vadd.f32 %v394, %v476
      %480 = vst.msk [vmem:[#allocation3] sm:$0xff] %vm342, %v479
      %v481 = vld [vmem:[%s312] sm:$0xf]
      %482 = vst.msk [vmem:[#allocation2] sm:$0xf] %vm332, %v481
      %v483 = vld [vmem:[%s312] sm:$0xf]
      %485 = vrot.lane.b32.xlu0 %v483, 127
      %v486 = vpop.permute.xlu0 %485
      %488 = vst.msk [vmem:[#allocation2 + $0x8] sm:$0xf] %vm332, %v486
      %v489 = vld [vmem:[%s312] sm:$0xf]
      %491 = vrot.lane.b32.xlu0 %v489, 126
      %v492 = vpop.permute.xlu0 %491
      %494 = vst.msk [vmem:[#allocation2 + $0x10] sm:$0xf] %vm332, %v492
      %v495 = vld [vmem:[%s312] sm:$0xf]
      %497 = vrot.lane.b32.xlu0 %v495, 118
      %v498 = vpop.permute.xlu0 %497
      %500 = vst.msk [vmem:[#allocation2 + $0x18] sm:$0xf] %vm332, %v498
      %v501 = vld [vmem:[%s312] sm:$0xf]
      %503 = vrot.lane.b32.xlu0 %v501, 117
      %v504 = vpop.permute.xlu0 %503
      %506 = vst.msk [vmem:[#allocation2 + $0x20] sm:$0xf] %vm332, %v504
      %v507 = vld [vmem:[%s312] sm:$0xf]
      %509 = vrot.lane.b32.xlu0 %v507, 116
      %v510 = vpop.permute.xlu0 %509
      %512 = vst.msk [vmem:[#allocation2 + $0x28] sm:$0xf] %vm332, %v510
      %v513 = vld [vmem:[%s312] sm:$0xf]
      %515 = vrot.lane.b32.xlu0 %v513, 108
      %v516 = vpop.permute.xlu0 %515
      %518 = vst.msk [vmem:[#allocation2 + $0x30] sm:$0xf] %vm332, %v516
      %v519 = vld [vmem:[%s312] sm:$0xf]
      %521 = vrot.lane.b32.xlu0 %v519, 107
      %v522 = vpop.permute.xlu0 %521
      %524 = vst.msk [vmem:[#allocation2 + $0x38] sm:$0xf] %vm332, %v522
      %v525 = vld [vmem:[%s312] sm:$0xf]
      %527 = vrot.lane.b32.xlu0 %v525, 106
      %v528 = vpop.permute.xlu0 %527
      %530 = vst.msk [vmem:[#allocation2 + $0x40] sm:$0xf] %vm332, %v528
      %v531 = vld [vmem:[#allocation3] sm:$0xff]
      %s532 = scalar_lea.vmem %s3, 8
      %v533 = vld [vmem:[%s532] sm:$0xff]
      %v534 = vld [vmem:[#allocation2] sm:$0xff]
      %v535 = vld [vmem:[#allocation2 + $0x8] sm:$0xff]
      %v536 = vld [vmem:[#allocation2 + $0x10] sm:$0xff]
      %v537 = vld [vmem:[#allocation2 + $0x18] sm:$0xff]
      %v538 = vld [vmem:[#allocation2 + $0x20] sm:$0xff]
      %v539 = vld [vmem:[#allocation2 + $0x28] sm:$0xff]
      %v540 = vld [vmem:[#allocation2 + $0x30] sm:$0xff]
      %v541 = vld [vmem:[#allocation2 + $0x38] sm:$0xff]
      %v542 = vld [vmem:[#allocation2 + $0x40] sm:$0xff]
      %v544 = vsel %vm405, %v533, 0
      %546 = vmatprep.subr.mxu0 0.0
      %547 = vmatpush1.msra.mxu0 0.0
      %548 = vmatprep.subr.mxu0 0.0
      %549 = vmatpush1.msra.mxu0 0.0
      %550 = vmatprep.subr.mxu0 0.0
      %551 = vmatpush1.msra.mxu0 0.0
      %552 = vmatprep.subr.mxu0 0.0
      %553 = vmatpush1.msra.mxu0 0.0
      %554 = vmatprep.subr.mxu0 0.0
      %555 = vmatpush1.msra.mxu0 0.0
      %556 = vmatprep.subr.mxu0 0.0
      %557 = vmatpush1.msra.mxu0 0.0
      %558 = vmatprep.subr.mxu0 0.0
      %559 = vmatpush1.msra.mxu0 0.0
      %560 = vmatprep.subr.mxu0 0.0
      %561 = vmatpush1.msra.mxu0 %v542
      %562 = vmatprep.subr.mxu0 0.0
      %563 = vmatpush1.msra.mxu0 %v541
      %564 = vmatprep.subr.mxu0 0.0
      %565 = vmatpush1.msra.mxu0 %v540
      %566 = vmatprep.subr.mxu0 0.0
      %567 = vmatpush1.msra.mxu0 %v539
      %568 = vmatprep.subr.mxu0 0.0
      %569 = vmatpush1.msra.mxu0 %v538
      %570 = vmatprep.subr.mxu0 0.0
      %571 = vmatpush1.msra.mxu0 %v537
      %572 = vmatprep.subr.mxu0 0.0
      %573 = vmatpush1.msra.mxu0 %v536
      %574 = vmatprep.subr.mxu0 0.0
      %575 = vmatpush1.msra.mxu0 %v535
      %576 = vmatprep.subr.mxu0 0.0
      %577 = vmatpush1.msra.mxu0 %v534
      %578 = vmatprep.subr.mxu0 0.0
      %579 = vmatpush2.msra.mxu0 0.0
      %580 = vmatprep.subr.mxu0 0.0
      %581 = vmatpush2.msra.mxu0 0.0
      %582 = vmatprep.subr.mxu0 0.0
      %583 = vmatpush2.msra.mxu0 0.0
      %584 = vmatprep.subr.mxu0 0.0
      %585 = vmatpush2.msra.mxu0 0.0
      %586 = vmatprep.subr.mxu0 0.0
      %587 = vmatpush2.msra.mxu0 0.0
      %588 = vmatprep.subr.mxu0 0.0
      %589 = vmatpush2.msra.mxu0 0.0
      %590 = vmatprep.subr.mxu0 0.0
      %591 = vmatpush2.msra.mxu0 0.0
      %592 = vmatprep.subr.mxu0 0.0
      %593 = vmatpush2.msra.mxu0 0.0
      %594 = vmatprep.subr.mxu0 0.0
      %595 = vmatpush2.msra.mxu0 0.0
      %596 = vmatprep.subr.mxu0 0.0
      %597 = vmatpush2.msra.mxu0 0.0
      %598 = vmatprep.subr.mxu0 0.0
      %599 = vmatpush2.msra.mxu0 0.0
      %600 = vmatprep.subr.mxu0 0.0
      %601 = vmatpush2.msra.mxu0 0.0
      %602 = vmatprep.subr.mxu0 0.0
      %603 = vmatpush2.msra.mxu0 0.0
      %604 = vmatprep.subr.mxu0 0.0
      %605 = vmatpush2.msra.mxu0 0.0
      %606 = vmatprep.subr.mxu0 0.0
      %607 = vmatpush2.msra.mxu0 0.0
      %608 = vmatprep.subr.mxu0 0.0
      %609 = vmatpush2.msra.mxu0 0.0
      %610 = vmatprep.mubr.f32.mxu0 0.0
      %611 = vmatmul.mubr.f32.gmra.mxu0 %v544
      %v612 = vpop.f32.mrf.mxu0
      %v613 = vadd.f32 0.0, %v612
      %v614 = vpop.f32.mrf.mxu0
      %615 = vdwg.mxu0
      %v616 = vadd.f32 %v531, %v613
      %617 = vst.msk [vmem:[#allocation3] sm:$0xff] %vm342, %v616
      %v618 = vld [vmem:[%s322] sm:$0xf]
      %619 = vst.msk [vmem:[#allocation2] sm:$0xf] %vm332, %v618
      %v620 = vld [vmem:[%s322] sm:$0xf]
      %622 = vrot.lane.b32.xlu0 %v620, 127
      %v623 = vpop.permute.xlu0 %622
      %625 = vst.msk [vmem:[#allocation2 + $0x8] sm:$0xf] %vm332, %v623
      %v626 = vld [vmem:[%s322] sm:$0xf]
      %628 = vrot.lane.b32.xlu0 %v626, 126
      %v629 = vpop.permute.xlu0 %628
      %631 = vst.msk [vmem:[#allocation2 + $0x10] sm:$0xf] %vm332, %v629
      %v632 = vld [vmem:[%s322] sm:$0xf]
      %634 = vrot.lane.b32.xlu0 %v632, 118
      %v635 = vpop.permute.xlu0 %634
      %637 = vst.msk [vmem:[#allocation2 + $0x18] sm:$0xf] %vm332, %v635
      %v638 = vld [vmem:[%s322] sm:$0xf]
      %640 = vrot.lane.b32.xlu0 %v638, 117
      %v641 = vpop.permute.xlu0 %640
      %643 = vst.msk [vmem:[#allocation2 + $0x20] sm:$0xf] %vm332, %v641
      %v644 = vld [vmem:[%s322] sm:$0xf]
      %646 = vrot.lane.b32.xlu0 %v644, 116
      %v647 = vpop.permute.xlu0 %646
      %649 = vst.msk [vmem:[#allocation2 + $0x28] sm:$0xf] %vm332, %v647
      %v650 = vld [vmem:[%s322] sm:$0xf]
      %652 = vrot.lane.b32.xlu0 %v650, 108
      %v653 = vpop.permute.xlu0 %652
      %655 = vst.msk [vmem:[#allocation2 + $0x30] sm:$0xf] %vm332, %v653
      %v656 = vld [vmem:[%s322] sm:$0xf]
      %658 = vrot.lane.b32.xlu0 %v656, 107
      %v659 = vpop.permute.xlu0 %658
      %661 = vst.msk [vmem:[#allocation2 + $0x38] sm:$0xf] %vm332, %v659
      %v662 = vld [vmem:[%s322] sm:$0xf]
      %664 = vrot.lane.b32.xlu0 %v662, 106
      %v665 = vpop.permute.xlu0 %664
      %667 = vst.msk [vmem:[#allocation2 + $0x40] sm:$0xf] %vm332, %v665
      %v668 = vld [vmem:[#allocation3] sm:$0xff]
      %s669 = scalar_lea.vmem %s3, 16
      %v670 = vld [vmem:[%s669] sm:$0xff]
      %v671 = vld [vmem:[#allocation2] sm:$0xff]
      %v672 = vld [vmem:[#allocation2 + $0x8] sm:$0xff]
      %v673 = vld [vmem:[#allocation2 + $0x10] sm:$0xff]
      %v674 = vld [vmem:[#allocation2 + $0x18] sm:$0xff]
      %v675 = vld [vmem:[#allocation2 + $0x20] sm:$0xff]
      %v676 = vld [vmem:[#allocation2 + $0x28] sm:$0xff]
      %v677 = vld [vmem:[#allocation2 + $0x30] sm:$0xff]
      %v678 = vld [vmem:[#allocation2 + $0x38] sm:$0xff]
      %v679 = vld [vmem:[#allocation2 + $0x40] sm:$0xff]
      %v681 = vsel %vm405, %v670, 0
      %683 = vmatprep.subr.mxu0 0.0
      %684 = vmatpush1.msra.mxu0 0.0
      %685 = vmatprep.subr.mxu0 0.0
      %686 = vmatpush1.msra.mxu0 0.0
      %687 = vmatprep.subr.mxu0 0.0
      %688 = vmatpush1.msra.mxu0 0.0
      %689 = vmatprep.subr.mxu0 0.0
      %690 = vmatpush1.msra.mxu0 0.0
      %691 = vmatprep.subr.mxu0 0.0
      %692 = vmatpush1.msra.mxu0 0.0
      %693 = vmatprep.subr.mxu0 0.0
      %694 = vmatpush1.msra.mxu0 0.0
      %695 = vmatprep.subr.mxu0 0.0
      %696 = vmatpush1.msra.mxu0 0.0
      %697 = vmatprep.subr.mxu0 0.0
      %698 = vmatpush1.msra.mxu0 %v679
      %699 = vmatprep.subr.mxu0 0.0
      %700 = vmatpush1.msra.mxu0 %v678
      %701 = vmatprep.subr.mxu0 0.0
      %702 = vmatpush1.msra.mxu0 %v677
      %703 = vmatprep.subr.mxu0 0.0
      %704 = vmatpush1.msra.mxu0 %v676
      %705 = vmatprep.subr.mxu0 0.0
      %706 = vmatpush1.msra.mxu0 %v675
      %707 = vmatprep.subr.mxu0 0.0
      %708 = vmatpush1.msra.mxu0 %v674
      %709 = vmatprep.subr.mxu0 0.0
      %710 = vmatpush1.msra.mxu0 %v673
      %711 = vmatprep.subr.mxu0 0.0
      %712 = vmatpush1.msra.mxu0 %v672
      %713 = vmatprep.subr.mxu0 0.0
      %714 = vmatpush1.msra.mxu0 %v671
      %715 = vmatprep.subr.mxu0 0.0
      %716 = vmatpush2.msra.mxu0 0.0
      %717 = vmatprep.subr.mxu0 0.0
      %718 = vmatpush2.msra.mxu0 0.0
      %719 = vmatprep.subr.mxu0 0.0
      %720 = vmatpush2.msra.mxu0 0.0
      %721 = vmatprep.subr.mxu0 0.0
      %722 = vmatpush2.msra.mxu0 0.0
      %723 = vmatprep.subr.mxu0 0.0
      %724 = vmatpush2.msra.mxu0 0.0
      %725 = vmatprep.subr.mxu0 0.0
      %726 = vmatpush2.msra.mxu0 0.0
      %727 = vmatprep.subr.mxu0 0.0
      %728 = vmatpush2.msra.mxu0 0.0
      %729 = vmatprep.subr.mxu0 0.0
      %730 = vmatpush2.msra.mxu0 0.0
      %731 = vmatprep.subr.mxu0 0.0
      %732 = vmatpush2.msra.mxu0 0.0
      %733 = vmatprep.subr.mxu0 0.0
      %734 = vmatpush2.msra.mxu0 0.0
      %735 = vmatprep.subr.mxu0 0.0
      %736 = vmatpush2.msra.mxu0 0.0
      %737 = vmatprep.subr.mxu0 0.0
      %738 = vmatpush2.msra.mxu0 0.0
      %739 = vmatprep.subr.mxu0 0.0
      %740 = vmatpush2.msra.mxu0 0.0
      %741 = vmatprep.subr.mxu0 0.0
      %742 = vmatpush2.msra.mxu0 0.0
      %743 = vmatprep.subr.mxu0 0.0
      %744 = vmatpush2.msra.mxu0 0.0
      %745 = vmatprep.subr.mxu0 0.0
      %746 = vmatpush2.msra.mxu0 0.0
      %747 = vmatprep.mubr.f32.mxu0 0.0
      %748 = vmatmul.mubr.f32.gmra.mxu0 %v681
      %v749 = vpop.f32.mrf.mxu0
      %v750 = vadd.f32 0.0, %v749
      %v751 = vpop.f32.mrf.mxu0
      %752 = vdwg.mxu0
      %v753 = vadd.f32 %v668, %v750
      %754 = vst.msk [vmem:[#allocation3] sm:$0xff] %vm342, %v753
      %v755 = vld [vmem:[#allocation3] sm:$0xff]
      %v756 = vld [vmem:[%s4] sm:$0xff]
      %758 = vset.pattern.permute.xlu0 0
      %759 = vperm.xlu0 %758, %v756
      %v760 = vpop.permute.xlu0 %759
      %v762 = vadd.f32 %v755, %v760
      %vm763 = vcmp.ge.f32.partialorder %v762, 0.0
      %v764 = vmul.f32 %v762, 0.01
      %v765 = vsel %vm763, %v762, %v764
      %766 = vst.msk [vmem:[%s331] sm:$0xff] %vm342, %v765
      %p767 = scmp.lt.s32.totalorder %s20, 1
      %s768 = scalar_select %p767, %s20, 1
      %p769 = scmp.lt.s32.totalorder %s21, 7
      %s770 = scalar_select %p769, %s21, 7
      %s771 = smul.addr %s768, 8
      %s772 = sadd.s32 %s770, %s771
      %s773 = smul.addr %s772, 8
      %s774 = scalar_lea.vmem %s5, %s773
      // Predicated region
      $region41: #{conv_bn_relu_3d.1} parent=39 // pred_check
        %p775 = pneg %p178
      $region42: #{conv_bn_relu_3d.1} parent=39 // pred_check_branch
        %777 = sbr.rel (%p775) target = $region44
      $region43: #{conv_bn_relu_3d.1} parent=39 // pred_region
        _
      $region44: #{conv_bn_relu_3d.1} parent=39 // pred_fallthru
        _
    $region40: #{conv_bn_relu_3d.1} parent=5 // pred_fallthru
      _
    %p778 = scmp.le.s32.totalorder 2, %s11
    // Predicated region
    $region45: #{conv_bn_relu_3d.1} parent=5 // pred_check
      %p779 = pneg %p778
    $region46: #{conv_bn_relu_3d.1} parent=5 // pred_check_branch
      %781 = sbr.rel (%p779) target = $region48
    $region47: #{conv_bn_relu_3d.1} parent=5 // pred_region
      %s782 = ssub.s32 %s11, 2
      // Predicated region
      $region49: #{conv_bn_relu_3d.1} parent=47 // pred_check
        %p783 = pneg %p184
      $region50: #{conv_bn_relu_3d.1} parent=47 // pred_check_branch
        %785 = sbr.rel (%p783) target = $region52
      $region51: #{conv_bn_relu_3d.1} parent=47 // pred_region
        %p786 = scmp.lt.s32.totalorder %s22, 1
        %s787 = scalar_select %p786, %s22, 1
        %p788 = scmp.lt.s32.totalorder %s23, 7
        %s789 = scalar_select %p788, %s23, 7
        %s790 = smul.addr %s787, 8
        %s791 = sadd.s32 %s789, %s790
        %s792 = smul.addr %s791, 8
        %s793 = scalar_lea.vmem %s5, %s792
      $region52: #{conv_bn_relu_3d.1} parent=47 // pred_fallthru
        _
    $region48: #{conv_bn_relu_3d.1} parent=5 // pred_fallthru
      _
  $region6: #{conv_bn_relu_3d.1} parent=0 // loop_footer
    %s15 = sadd.s32 1, %s11
  $region7: #{conv_bn_relu_3d.1} parent=0 // loop_footer_branch
    %10 = sbr.rel target = $region3
  $region8: #{conv_bn_relu_3d.1} parent=0 // loop_exit
    _

</llo_original>
